<compile_context>
chip_gen: v5e
topology: v5e:2x2
jax: 0.10.0
libtpu: 0.0.40
codegen_flags: <defaults>
</compile_context>

<pallas_src>
import jax
import jax.numpy as jnp
import numpy as np
from jax.experimental import pallas as pl
from jax.experimental.pallas import tpu as pltpu

HPAD = 128                      # lane-padded hidden width (6 / 24 -> 128)
P_DROP = 0.3                    # nn.Dropout(0.3)
NEG_SLOPE = 0.01                # nn.LeakyReLU() default negative_slope
KEEP_SCALE = 1.0 / (1.0 - P_DROP)
DROP_THRESH = np.uint32(int(round(P_DROP * (2 ** 32))))   # P(bits < thr) ~= 0.3
TB_CAP = 1024                   # batch-tile cap (sweep 1024-4096 if needed)


def _leaky(v):
    # Exact LeakyReLU for finite v, one VALU op cheaper than where(v>=0,...).
    return jnp.maximum(v, NEG_SLOPE * v)


def _round_up(n, m):
    return ((n + m - 1) // m) * m


def _pad2d(a, shape):
    return jnp.pad(a, [(0, t - s) for s, t in zip(a.shape, shape)])


# ----------------------------------------------------------------------------
# Kernels (eval / train traced separately -> no runtime flag, no RNG in eval)
# ----------------------------------------------------------------------------
def _mlp_eval_kernel(x_ref, w1, b1, w2, b2, w3, b3, o_ref):
    x = x_ref[...].astype(jnp.float32)
    h = _leaky(jnp.dot(x, w1[...], preferred_element_type=jnp.float32) + b1[...])
    h = _leaky(jnp.dot(h, w2[...], preferred_element_type=jnp.float32) + b2[...])
    h = _leaky(jnp.dot(h, w3[...], preferred_element_type=jnp.float32) + b3[...])
    o_ref[...] = h.astype(o_ref.dtype)


def _mlp_train_kernel(x_ref, w1, b1, w2, b2, w3, b3, r1, r2, r3, o_ref):
    # Keep-scale of dropouts 1 & 2 is pre-folded into w2 / w3 by the wrapper,
    # so the masks here only zero; the final dropout keeps one multiply.
    x = x_ref[...].astype(jnp.float32)
    h = _leaky(jnp.dot(x, w1[...], preferred_element_type=jnp.float32) + b1[...])
    h = jnp.where(r1[...] >= DROP_THRESH, h, 0.0)
    h = _leaky(jnp.dot(h, w2[...], preferred_element_type=jnp.float32) + b2[...])
    h = jnp.where(r2[...] >= DROP_THRESH, h, 0.0)
    h = _leaky(jnp.dot(h, w3[...], preferred_element_type=jnp.float32) + b3[...])
    h = jnp.where(r3[...] >= DROP_THRESH, h * KEEP_SCALE, 0.0)
    o_ref[...] = h.astype(o_ref.dtype)


# ----------------------------------------------------------------------------
# Wrapper
# ----------------------------------------------------------------------------
def prepare_params(params, *, training=False):
    """Hoisted (once-per-params) padding + dropout-scale folding.

    params = (w1, b1, w2, b2, w3, b3) with wi stored as (in, out).
    Zero-padded rows/cols stay exactly zero through LeakyReLU and dropout,
    so padding does not change the useful outputs.
    """
    w1, b1, w2, b2, w3, b3 = params
    F = w1.shape[0]
    h_out = w3.shape[1]                       # 24
    s = KEEP_SCALE if training else 1.0       # fold dropout1/2 scale into w2/w3
    w1p = _pad2d(w1.astype(jnp.float32), (F, HPAD))
    b1p = _pad2d(b1.astype(jnp.float32)[None, :], (1, HPAD))
    w2p = _pad2d((w2 * s).astype(jnp.float32), (HPAD, HPAD))
    b2p = _pad2d(b2.astype(jnp.float32)[None, :], (1, HPAD))
    w3p = _pad2d((w3 * s).astype(jnp.float32), (HPAD, h_out))
    b3p = b3.astype(jnp.float32)[None, :]
    return (w1p, b1p, w2p, b2p, w3p, b3p)


def _batch_tiling(B):
    b8 = _round_up(B, 8)
    if b8 <= TB_CAP:
        tb = b8                                   # one step covers everything
    else:
        # >=2 grid steps so v7x's two TensorCores both get work; cap the tile.
        tb = min(TB_CAP, _round_up(pl.cdiv(b8, 2), 8))
    return b8, tb


def mlp_forward(prepped, x, *, training=False, rng_key=None):
    """Fused Pallas forward.  `prepped` comes from prepare_params()."""
    w1p, b1p, w2p, b2p, w3p, b3p = prepped
    B, F = x.shape
    h_out = w3p.shape[1]

    b8, tb = _batch_tiling(B)
    xp = x if b8 == B else _pad2d(x, (b8, F))

    in_specs = [
        pl.BlockSpec((tb, F), lambda i: (i, 0)),          # x tile
        pl.BlockSpec((F, HPAD), lambda i: (0, 0)),        # w1 (VMEM-resident)
        pl.BlockSpec((1, HPAD), lambda i: (0, 0)),        # b1
        pl.BlockSpec((HPAD, HPAD), lambda i: (0, 0)),     # w2
        pl.BlockSpec((1, HPAD), lambda i: (0, 0)),        # b2
        pl.BlockSpec((HPAD, h_out), lambda i: (0, 0)),    # w3
        pl.BlockSpec((1, h_out), lambda i: (0, 0)),       # b3
    ]
    args = [xp, w1p, b1p, w2p, b2p, w3p, b3p]
    kernel = _mlp_eval_kernel

    if training:
        # TODO(synk): dropout bits come from jax.random (host-side keys), not
        # torch's RNG stream; Bernoulli(0.3) keep-prob and 1/(1-p) scaling match.
        if rng_key is None:
            rng_key = jax.random.PRNGKey(0)
        k1, k2, k3 = jax.random.split(rng_key, 3)
        r1 = jax.random.bits(k1, (b8, HPAD), jnp.uint32)
        r2 = jax.random.bits(k2, (b8, HPAD), jnp.uint32)
        r3 = jax.random.bits(k3, (b8, h_out), jnp.uint32)
        in_specs += [
            pl.BlockSpec((tb, HPAD), lambda i: (i, 0)),
            pl.BlockSpec((tb, HPAD), lambda i: (i, 0)),
            pl.BlockSpec((tb, h_out), lambda i: (i, 0)),
        ]
        args += [r1, r2, r3]
        kernel = _mlp_train_kernel

    out = pl.pallas_call(
        kernel,
        out_shape=jax.ShapeDtypeStruct((b8, h_out), x.dtype),
        grid=(pl.cdiv(b8, tb),),
        in_specs=in_specs,
        out_specs=pl.BlockSpec((tb, h_out), lambda i: (i, 0)),
        compiler_params=pltpu.CompilerParams(
            dimension_semantics=("parallel",),   # batch tiles are independent
        ),
    )(*args)

    return out if b8 == B else out[:B]


# ----------------------------------------------------------------------------
# Pure-JAX references
# ----------------------------------------------------------------------------
def mlp_reference_eval(params, x):
    w1, b1, w2, b2, w3, b3 = params
    h = _leaky(x @ w1 + b1)
    h = _leaky(h @ w2 + b2)
    h = _leaky(h @ w3 + b3)
    return h


def mlp_reference_train(params, x, rng_key):
    """Mirrors the exact bit stream mlp_forward(training=True) consumes."""
    w1, b1, w2, b2, w3, b3 = params
    B = x.shape[0]
    b8, _ = _batch_tiling(B)
    h_out = w3.shape[1]
    k1, k2, k3 = jax.random.split(rng_key, 3)
    r1 = jax.random.bits(k1, (b8, HPAD), jnp.uint32)[:B, : w1.shape[1]]
    r2 = jax.random.bits(k2, (b8, HPAD), jnp.uint32)[:B, : w2.shape[1]]
    r3 = jax.random.bits(k3, (b8, h_out), jnp.uint32)[:B, :]
    h = _leaky(x @ w1 + b1)
    h = jnp.where(r1 >= DROP_THRESH, h * KEEP_SCALE, 0.0)
    h = _leaky(h @ w2 + b2)
    h = jnp.where(r2 >= DROP_THRESH, h * KEEP_SCALE, 0.0)
    h = _leaky(h @ w3 + b3)
    h = jnp.where(r3 >= DROP_THRESH, h * KEEP_SCALE, 0.0)
    return h


def init_params(key, feature_size):
    ks = jax.random.split(key, 6)

    def lin(kw, kb, fan_in, fan_out):
        bound = 1.0 / np.sqrt(fan_in)
        w = jax.random.uniform(kw, (fan_in, fan_out), jnp.float32, -bound, bound)
        b = jax.random.uniform(kb, (fan_out,), jnp.float32, -bound, bound)
        return w, b

    w1, b1 = lin(ks[0], ks[1], feature_size, 6)
    w2, b2 = lin(ks[2], ks[3], 6, 24)
    w3, b3 = lin(ks[4], ks[5], 24, 24)
    return (w1, b1, w2, b2, w3, b3)


if __name__ == "__main__":
    key = jax.random.PRNGKey(0)
    k_p, k_x, k_d = jax.random.split(key, 3)

    B, FEATURE_SIZE = 8, 16
    params = init_params(k_p, FEATURE_SIZE)
    x = jax.random.normal(k_x, (B, FEATURE_SIZE), dtype=jnp.float32)

    # Eval mode (dropout = identity): must match the pure-JAX reference.
    eval_params = prepare_params(params, training=False)
    y_eval = jax.block_until_ready(mlp_forward(eval_params, x, training=False))
    ref_eval = mlp_reference_eval(params, x)
    np.testing.assert_allclose(np.asarray(y_eval), np.asarray(ref_eval),
                               rtol=1e-4, atol=1e-5)

    # Train mode: same random bits as the reference -> identical masks; values
    # match up to fp rounding from the keep-scale folded into w2/w3.
    train_params = prepare_params(params, training=True)
    y_train = jax.block_until_ready(
        mlp_forward(train_params, x, training=True, rng_key=k_d))
    ref_train = mlp_reference_train(params, x, k_d)
    assert y_train.shape == (B, 24)
    np.testing.assert_allclose(np.asarray(y_train), np.asarray(ref_train),
                               rtol=1e-4, atol=1e-5)
    assert bool(jnp.all(jnp.isfinite(y_train)))

    print("KERNEL_OK")
</pallas_src>

<mosaic_0001>
module attributes {stable_mosaic.version = 11 : i64} {
  func.func @_mlp_eval_kernel(%arg0: i32, %arg1: memref<8x16xf32, #tpu.memory_space<vmem>>, %arg2: memref<16x128xf32, #tpu.memory_space<vmem>>, %arg3: memref<1x128xf32, #tpu.memory_space<vmem>>, %arg4: memref<128x128xf32, #tpu.memory_space<vmem>>, %arg5: memref<1x128xf32, #tpu.memory_space<vmem>>, %arg6: memref<128x24xf32, #tpu.memory_space<vmem>>, %arg7: memref<1x24xf32, #tpu.memory_space<vmem>>, %arg8: memref<8x24xf32, #tpu.memory_space<vmem>>) attributes {dimension_semantics = [#tpu.dimension_semantics<parallel>], iteration_bounds = array<i64: 1>, scalar_prefetch = 0 : i64, scratch_operands = 0 : i64, tpu.core_type = #tpu.core_type<tc>, window_params = [{transform_indices = @transform_0, window_bounds = array<i64: 8, 16>}, {pipeline_mode = #tpu.pipeline_mode<synchronous>, transform_indices = @transform_1, window_bounds = array<i64: 16, 128>}, {pipeline_mode = #tpu.pipeline_mode<synchronous>, transform_indices = @transform_2, window_bounds = array<i64: 1, 128>}, {pipeline_mode = #tpu.pipeline_mode<synchronous>, transform_indices = @transform_3, window_bounds = array<i64: 128, 128>}, {pipeline_mode = #tpu.pipeline_mode<synchronous>, transform_indices = @transform_4, window_bounds = array<i64: 1, 128>}, {pipeline_mode = #tpu.pipeline_mode<synchronous>, transform_indices = @transform_5, window_bounds = array<i64: 128, 24>}, {pipeline_mode = #tpu.pipeline_mode<synchronous>, transform_indices = @transform_6, window_bounds = array<i64: 1, 24>}, {transform_indices = @transform_7, window_bounds = array<i64: 8, 24>}]} {
    %c0 = arith.constant 0 : index
    %c0_0 = arith.constant 0 : index
    %0 = vector.load %arg1[%c0, %c0_0] : memref<8x16xf32, #tpu.memory_space<vmem>>, vector<8x16xf32>
    %c0_1 = arith.constant 0 : index
    %c0_2 = arith.constant 0 : index
    %1 = vector.load %arg2[%c0_1, %c0_2] : memref<16x128xf32, #tpu.memory_space<vmem>>, vector<16x128xf32>
    %cst = arith.constant dense<0.000000e+00> : vector<8x128xf32>
    %2 = tpu.matmul %0, %1, %cst {dimension_numbers = #tpu.dot_dimension_numbers<[1], [0], [0], [1], [0, 0, 1, 1], [], []>} : vector<8x16xf32>, vector<16x128xf32>, vector<8x128xf32> -> vector<8x128xf32>
    %c0_3 = arith.constant 0 : index
    %c0_4 = arith.constant 0 : index
    %3 = vector.load %arg3[%c0_3, %c0_4] : memref<1x128xf32, #tpu.memory_space<vmem>>, vector<1x128xf32>
    %4 = vector.broadcast %3 : vector<1x128xf32> to vector<8x128xf32>
    %5 = arith.addf %2, %4 : vector<8x128xf32>
    %cst_5 = arith.constant 0.00999999977 : f32
    %6 = vector.broadcast %cst_5 : f32 to vector<8x128xf32>
    %7 = arith.mulf %6, %5 : vector<8x128xf32>
    %8 = arith.maximumf %5, %7 : vector<8x128xf32>
    %c0_6 = arith.constant 0 : index
    %c0_7 = arith.constant 0 : index
    %9 = vector.load %arg4[%c0_6, %c0_7] : memref<128x128xf32, #tpu.memory_space<vmem>>, vector<128x128xf32>
    %cst_8 = arith.constant dense<0.000000e+00> : vector<8x128xf32>
    %10 = tpu.matmul %8, %9, %cst_8 {dimension_numbers = #tpu.dot_dimension_numbers<[1], [0], [0], [1], [0, 0, 1, 1], [], []>} : vector<8x128xf32>, vector<128x128xf32>, vector<8x128xf32> -> vector<8x128xf32>
    %c0_9 = arith.constant 0 : index
    %c0_10 = arith.constant 0 : index
    %11 = vector.load %arg5[%c0_9, %c0_10] : memref<1x128xf32, #tpu.memory_space<vmem>>, vector<1x128xf32>
    %12 = vector.broadcast %11 : vector<1x128xf32> to vector<8x128xf32>
    %13 = arith.addf %10, %12 : vector<8x128xf32>
    %cst_11 = arith.constant 0.00999999977 : f32
    %14 = vector.broadcast %cst_11 : f32 to vector<8x128xf32>
    %15 = arith.mulf %14, %13 : vector<8x128xf32>
    %16 = arith.maximumf %13, %15 : vector<8x128xf32>
    %c0_12 = arith.constant 0 : index
    %c0_13 = arith.constant 0 : index
    %17 = vector.load %arg6[%c0_12, %c0_13] : memref<128x24xf32, #tpu.memory_space<vmem>>, vector<128x24xf32>
    %cst_14 = arith.constant dense<0.000000e+00> : vector<8x24xf32>
    %18 = tpu.matmul %16, %17, %cst_14 {dimension_numbers = #tpu.dot_dimension_numbers<[1], [0], [0], [1], [0, 0, 1, 1], [], []>} : vector<8x128xf32>, vector<128x24xf32>, vector<8x24xf32> -> vector<8x24xf32>
    %c0_15 = arith.constant 0 : index
    %c0_16 = arith.constant 0 : index
    %19 = vector.load %arg7[%c0_15, %c0_16] : memref<1x24xf32, #tpu.memory_space<vmem>>, vector<1x24xf32>
    %20 = vector.broadcast %19 : vector<1x24xf32> to vector<8x24xf32>
    %21 = arith.addf %18, %20 : vector<8x24xf32>
    %cst_17 = arith.constant 0.00999999977 : f32
    %22 = vector.broadcast %cst_17 : f32 to vector<8x24xf32>
    %23 = arith.mulf %22, %21 : vector<8x24xf32>
    %24 = arith.maximumf %21, %23 : vector<8x24xf32>
    %c0_18 = arith.constant 0 : index
    %c0_19 = arith.constant 0 : index
    %25 = vector.load %arg8[%c0_18, %c0_19] : memref<8x24xf32, #tpu.memory_space<vmem>>, vector<8x24xf32>
    tpu.vector_store %arg8[%c0_18, %c0_19], %24 {strides = array<i32>} : memref<8x24xf32, #tpu.memory_space<vmem>>, vector<8x24xf32>,
    return
  }
  func.func @transform_0(%arg0: i32) -> (i32, i32) {
    %c0_i32 = arith.constant 0 : i32
    %c0_i32_0 = arith.constant 0 : i32
    return %arg0, %c0_i32 : i32, i32
  }
  func.func @transform_1(%arg0: i32) -> (i32, i32) {
    %c0_i32 = arith.constant 0 : i32
    %c0_i32_0 = arith.constant 0 : i32
    %c0_i32_1 = arith.constant 0 : i32
    return %c0_i32, %c0_i32_0 : i32, i32
  }
  func.func @transform_2(%arg0: i32) -> (i32, i32) {
    %c0_i32 = arith.constant 0 : i32
    %c0_i32_0 = arith.constant 0 : i32
    %c0_i32_1 = arith.constant 0 : i32
    return %c0_i32, %c0_i32_0 : i32, i32
  }
  func.func @transform_3(%arg0: i32) -> (i32, i32) {
    %c0_i32 = arith.constant 0 : i32
    %c0_i32_0 = arith.constant 0 : i32
    %c0_i32_1 = arith.constant 0 : i32
    return %c0_i32, %c0_i32_0 : i32, i32
  }
  func.func @transform_4(%arg0: i32) -> (i32, i32) {
    %c0_i32 = arith.constant 0 : i32
    %c0_i32_0 = arith.constant 0 : i32
    %c0_i32_1 = arith.constant 0 : i32
    return %c0_i32, %c0_i32_0 : i32, i32
  }
  func.func @transform_5(%arg0: i32) -> (i32, i32) {
    %c0_i32 = arith.constant 0 : i32
    %c0_i32_0 = arith.constant 0 : i32
    %c0_i32_1 = arith.constant 0 : i32
    return %c0_i32, %c0_i32_0 : i32, i32
  }
  func.func @transform_6(%arg0: i32) -> (i32, i32) {
    %c0_i32 = arith.constant 0 : i32
    %c0_i32_0 = arith.constant 0 : i32
    %c0_i32_1 = arith.constant 0 : i32
    return %c0_i32, %c0_i32_0 : i32, i32
  }
  func.func @transform_7(%arg0: i32) -> (i32, i32) {
    %c0_i32 = arith.constant 0 : i32
    %c0_i32_0 = arith.constant 0 : i32
    return %arg0, %c0_i32 : i32, i32
  }
}

</mosaic_0001>

<llo_original>
// kernel: tpu_custom_call.1
$region0: #{tpu_custom_call.1}
  #allocation0 [shape = 'u32[]', space=smem, size = 0x4, offset = 0x4, fixed_abs, tag = 'smem constant byte address 0x4 - core index']
  #allocation1 [shape = 'u32[72,128]{1,0:T(1,128)}', space=vmem, size = 0x9000, scoped, tag = 'internal scratch']
  %s0 = inlined_call_operand.vmem [shape: f32[8,16], index: 0, kind: input, shape index: {}]
  %s1 = inlined_call_operand.vmem [shape: f32[16,128], index: 1, kind: input, shape index: {}]
  %s2 = inlined_call_operand.vmem [shape: f32[1,128], index: 2, kind: input, shape index: {}]
  %s3 = inlined_call_operand.vmem [shape: f32[128,128], index: 3, kind: input, shape index: {}]
  %s4 = inlined_call_operand.vmem [shape: f32[1,128], index: 4, kind: input, shape index: {}]
  %s5 = inlined_call_operand.vmem [shape: f32[128,24], index: 5, kind: input, shape index: {}]
  %s6 = inlined_call_operand.vmem [shape: f32[1,24], index: 6, kind: input, shape index: {}]
  %s7 = inlined_call_operand.hbm [shape: f32[8,24], index: 7, kind: output, shape index: {}]
  %s8 = sld [smem:[#allocation0]]
  $region38: #{tpu_custom_call.1} parent=0
    _
  %s10 = ssub.s32 1, %s8
  %s11 = scalar_select 0, %s10, %s8
  $region1: #{tpu_custom_call.1} parent=0
    #allocation2 [shape = 'u8[4096]{0}', space=vmem, size = 0x1000, scoped, tag = 'output window, operand 0, single buffered']
    #allocation3 [shape = 's32[1]{0}', space=sflag, size = 0x4, scoped, tag = 'scoped memory for tpu_custom_call.1']
    %12 = vsyncpa [#allocation3], 0
    // Predicated region
    $region2: #{tpu_custom_call.1} parent=1 // pred_check
      _
    $region3: #{tpu_custom_call.1} parent=1 // pred_check_branch
      %14 = sbr.rel (0) target = $region5
    $region4: #{tpu_custom_call.1} parent=1 // pred_region
      _
    $region5: #{tpu_custom_call.1} parent=1 // pred_fallthru
      _
    // Predicated region
    $region6: #{tpu_custom_call.1} parent=1 // pred_check
      _
    $region7: #{tpu_custom_call.1} parent=1 // pred_check_branch
      %16 = sbr.rel (0) target = $region9
    $region8: #{tpu_custom_call.1} parent=1 // pred_region
      _
    $region9: #{tpu_custom_call.1} parent=1 // pred_fallthru
      _
    // Predicated region
    $region10: #{tpu_custom_call.1} parent=1 // pred_check
      _
    $region11: #{tpu_custom_call.1} parent=1 // pred_check_branch
      %18 = sbr.rel (0) target = $region13
    $region12: #{tpu_custom_call.1} parent=1 // pred_region
      _
    $region13: #{tpu_custom_call.1} parent=1 // pred_fallthru
      _
    // Predicated region
    $region14: #{tpu_custom_call.1} parent=1 // pred_check
      _
    $region15: #{tpu_custom_call.1} parent=1 // pred_check_branch
      %20 = sbr.rel (0) target = $region17
    $region16: #{tpu_custom_call.1} parent=1 // pred_region
      _
    $region17: #{tpu_custom_call.1} parent=1 // pred_fallthru
      _
    // Predicated region
    $region18: #{tpu_custom_call.1} parent=1 // pred_check
      _
    $region19: #{tpu_custom_call.1} parent=1 // pred_check_branch
      %22 = sbr.rel (0) target = $region21
    $region20: #{tpu_custom_call.1} parent=1 // pred_region
      _
    $region21: #{tpu_custom_call.1} parent=1 // pred_fallthru
      _
    // Predicated region
    $region22: #{tpu_custom_call.1} parent=1 // pred_check
      _
    $region23: #{tpu_custom_call.1} parent=1 // pred_check_branch
      %24 = sbr.rel (0) target = $region25
    $region24: #{tpu_custom_call.1} parent=1 // pred_region
      _
    $region25: #{tpu_custom_call.1} parent=1 // pred_fallthru
      _
    // Predicated region
    $region26: #{tpu_custom_call.1} parent=1 // pred_check
      _
    $region27: #{tpu_custom_call.1} parent=1 // pred_check_branch
      %26 = sbr.rel (0) target = $region29
    $region28: #{tpu_custom_call.1} parent=1 // pred_region
      _
    $region29: #{tpu_custom_call.1} parent=1 // pred_fallthru
      _
    %v27 = vld [vmem:[%s0] sm:$0xff]
    %v28 = vld [vmem:[%s1] sm:$0xff]
    %v29 = vld [vmem:[%s1 + $0x8] sm:$0xff]
    %v30 = vld [vmem:[%s2] sm:$0x1]
    %v32 = vperm.slane %v30, 0
    %vm34 = vcmask 130048
    %v36 = vsel %vm34, %v27, 0
    %38 = vmatpush.msra.mxu0 0.0
    %39 = vmatpush.msra.mxu0 0.0
    %40 = vmatpush.msra.mxu0 0.0
    %41 = vmatpush.msra.mxu0 0.0
    %42 = vmatpush.msra.mxu0 0.0
    %43 = vmatpush.msra.mxu0 0.0
    %44 = vmatpush.msra.mxu0 0.0
    %45 = vmatpush.msra.mxu0 0.0
    %46 = vmatpush.msra.mxu0 0.0
    %47 = vmatpush.msra.mxu0 0.0
    %48 = vmatpush.msra.mxu0 0.0
    %49 = vmatpush.msra.mxu0 0.0
    %50 = vmatpush.msra.mxu0 0.0
    %51 = vmatpush.msra.mxu0 0.0
    %52 = vmatpush.msra.mxu0 %v29
    %53 = vmatpush.msra.mxu0 %v28
    %54 = vmatmul.f32.gmra.mxu0 %v36
    %v55 = vpop.f32.mrf.mxu0
    %v56 = vadd.f32 %v32, %v55
    %57 = vdwg.mxu0
    %v58 = vmul.f32 %v56, 0.01
    %v59 = vmax.f32 %v56, %v58
    %v60 = vld [vmem:[%s3] sm:$0xff]
    %v61 = vld [vmem:[%s3 + $0x8] sm:$0xff]
    %v62 = vld [vmem:[%s3 + $0x10] sm:$0xff]
    %v63 = vld [vmem:[%s3 + $0x18] sm:$0xff]
    %v64 = vld [vmem:[%s3 + $0x20] sm:$0xff]
    %v65 = vld [vmem:[%s3 + $0x28] sm:$0xff]
    %v66 = vld [vmem:[%s3 + $0x30] sm:$0xff]
    %v67 = vld [vmem:[%s3 + $0x38] sm:$0xff]
    %v68 = vld [vmem:[%s3 + $0x40] sm:$0xff]
    %v69 = vld [vmem:[%s3 + $0x48] sm:$0xff]
    %v70 = vld [vmem:[%s3 + $0x50] sm:$0xff]
    %v71 = vld [vmem:[%s3 + $0x58] sm:$0xff]
    %v72 = vld [vmem:[%s3 + $0x60] sm:$0xff]
    %v73 = vld [vmem:[%s3 + $0x68] sm:$0xff]
    %v74 = vld [vmem:[%s3 + $0x70] sm:$0xff]
    %v75 = vld [vmem:[%s3 + $0x78] sm:$0xff]
    %v76 = vld [vmem:[%s4] sm:$0x1]
    %v78 = vperm.slane %v76, 0
    %80 = vmatpush.msra.mxu0 %v75
    %81 = vmatpush.msra.mxu0 %v74
    %82 = vmatpush.msra.mxu0 %v73
    %83 = vmatpush.msra.mxu0 %v72
    %84 = vmatpush.msra.mxu0 %v71
    %85 = vmatpush.msra.mxu0 %v70
    %86 = vmatpush.msra.mxu0 %v69
    %87 = vmatpush.msra.mxu0 %v68
    %88 = vmatpush.msra.mxu0 %v67
    %89 = vmatpush.msra.mxu0 %v66
    %90 = vmatpush.msra.mxu0 %v65
    %91 = vmatpush.msra.mxu0 %v64
    %92 = vmatpush.msra.mxu0 %v63
    %93 = vmatpush.msra.mxu0 %v62
    %94 = vmatpush.msra.mxu0 %v61
    %95 = vmatpush.msra.mxu0 %v60
    %96 = vmatmul.f32.gmra.mxu0 %v59
    %v97 = vpop.f32.mrf.mxu0
    %v98 = vadd.f32 %v78, %v97
    %99 = vdwg.mxu0
    %v100 = vmul.f32 %v98, 0.01
    %v101 = vmax.f32 %v98, %v100
    %v102 = vld [vmem:[%s5] sm:$0xff]
    %v103 = vld [vmem:[%s5 + $0x8] sm:$0xff]
    %v104 = vld [vmem:[%s5 + $0x10] sm:$0xff]
    %v105 = vld [vmem:[%s5 + $0x18] sm:$0xff]
    %v106 = vld [vmem:[%s5 + $0x20] sm:$0xff]
    %v107 = vld [vmem:[%s5 + $0x28] sm:$0xff]
    %v108 = vld [vmem:[%s5 + $0x30] sm:$0xff]
    %v109 = vld [vmem:[%s5 + $0x38] sm:$0xff]
    %v110 = vld [vmem:[%s5 + $0x40] sm:$0xff]
    %v111 = vld [vmem:[%s5 + $0x48] sm:$0xff]
    %v112 = vld [vmem:[%s5 + $0x50] sm:$0xff]
    %v113 = vld [vmem:[%s5 + $0x58] sm:$0xff]
    %v114 = vld [vmem:[%s5 + $0x60] sm:$0xff]
    %v115 = vld [vmem:[%s5 + $0x68] sm:$0xff]
    %v116 = vld [vmem:[%s5 + $0x70] sm:$0xff]
    %v117 = vld [vmem:[%s5 + $0x78] sm:$0xff]
    %v118 = vld [vmem:[%s6] sm:$0x1]
    %v120 = vperm.slane %v118, 0
    %122 = vmatpush.msra.mxu0 %v117
    %123 = vmatpush.msra.mxu0 %v116
    %124 = vmatpush.msra.mxu0 %v115
    %125 = vmatpush.msra.mxu0 %v114
    %126 = vmatpush.msra.mxu0 %v113
    %127 = vmatpush.msra.mxu0 %v112
    %128 = vmatpush.msra.mxu0 %v111
    %129 = vmatpush.msra.mxu0 %v110
    %130 = vmatpush.msra.mxu0 %v109
    %131 = vmatpush.msra.mxu0 %v108
    %132 = vmatpush.msra.mxu0 %v107
    %133 = vmatpush.msra.mxu0 %v106
    %134 = vmatpush.msra.mxu0 %v105
    %135 = vmatpush.msra.mxu0 %v104
    %136 = vmatpush.msra.mxu0 %v103
    %137 = vmatpush.msra.mxu0 %v102
    %138 = vmatmul.f32.gmra.mxu0 %v101
    %v139 = vpop.f32.mrf.mxu0
    %v140 = vadd.f32 %v120, %v139
    %141 = vdwg.mxu0
    %v142 = vmul.f32 %v140, 0.01
    %v143 = vmax.f32 %v140, %v142
    %vm144 = vcmask 195584
    %145 = vst.msk [vmem:[#allocation2] sm:$0xff] %vm144, %v143
    // Predicated region
    $region30: #{tpu_custom_call.1} parent=1 // pred_check
      _
    $region31: #{tpu_custom_call.1} parent=1 // pred_check_branch
      %147 = sbr.rel (0) target = $region33
    $region32: #{tpu_custom_call.1} parent=1 // pred_region
      %149 = vsyncadd [#allocation3], 0
      %s151 = sshll.u32 [#allocation2], 4
      %s152 = int_to_ptr.vmem [resolvable:$true] %s151
      %s153 = sshll.u32 %s7, 4
      %s154 = int_to_ptr.hbm [resolvable:$true] %s153
      %156 = dma.vmem_to_hbm [thread:$0]  %s152, 128, %s154, [#allocation3]
    $region33: #{tpu_custom_call.1} parent=1 // pred_fallthru
      _
    // Predicated region
    $region34: #{tpu_custom_call.1} parent=1 // pred_check
      _
    $region35: #{tpu_custom_call.1} parent=1 // pred_check_branch
      %158 = sbr.rel (0) target = $region37
    $region36: #{tpu_custom_call.1} parent=1 // pred_region
      %160 = dma.done [#allocation3], 128
    $region37: #{tpu_custom_call.1} parent=1 // pred_fallthru
      _
    %161 = vsyncpa [#allocation3], 1

</llo_original>
